<compile_context>
chip_gen: v7x
topology: tpu7x:2x2x1
jax: 0.10.0
libtpu: 0.0.40
codegen_flags: <defaults>
</compile_context>

<pallas_src>
import jax
import jax.numpy as jnp
from jax.experimental import pallas as pl
from jax.experimental.pallas import tpu as pltpu

LANE = 128
# Per-block VMEM footprint target (input tile + output tile, single buffer).
# The Pallas pipeline double-buffers => ~2x this in scoped VMEM; 8 MiB keeps
# us in the measured ~85%+ HBM-roofline regime and under the 32 MiB scoped
# limit requested below (v7x physical VMEM is 64 MiB, so still safe).
TARGET_BLOCK_BYTES = 8 * 1024 * 1024
# Only split into >= 2 grid steps (DMA overlap / v7x dual-core sharding) once
# there is at least this much total traffic.
MIN_SPLIT_BYTES = 1 * 1024 * 1024


def _sublanes(dtype) -> int:
    """Native sublane tile height for a dtype (packed dtypes pack sublanes)."""
    return {1: 32, 2: 16}.get(jnp.dtype(dtype).itemsize, 8)


def _out_dtype(in_dtype):
    """Match PyTorch `x / 255.0`: floats keep dtype, ints promote to float32."""
    d = jnp.dtype(in_dtype)
    return d if jnp.issubdtype(d, jnp.floating) else jnp.dtype(jnp.float32)


def _make_kernel(out_dtype):
    def _lambda_kernel(x_ref, o_ref):
        # func = lambda x: x / 255.0 (compute in f32 on the VPU, cast on store)
        x = x_ref[...].astype(jnp.float32)
        o_ref[...] = (x / jnp.float32(255.0)).astype(out_dtype)
    return _lambda_kernel


def lambda_forward(x):
    """Apply Lambda(func=lambda t: t / 255.0) via a Pallas TPU kernel."""
    out_dtype = _out_dtype(x.dtype)

    if x.ndim == 0 or x.size == 0:
        return (x.astype(jnp.float32) / 255.0).astype(out_dtype)

    orig_shape = x.shape
    # Collapse only the leading dims: (d0,...,dk,H,W) -> (d0*...*dk*H, W).
    # Metadata-only on TPU whenever H % sublanes == 0 (no relayout pass),
    # unlike a flatten to (-1, 128).  The last dim stays full-extent so the
    # BlockSpec is exempt from the 128-lane divisibility rule.
    x2d = x.reshape(1, x.shape[0]) if x.ndim == 1 else x.reshape(-1, x.shape[-1])
    R, W = x2d.shape

    in_item = jnp.dtype(x.dtype).itemsize
    out_item = jnp.dtype(out_dtype).itemsize
    row_align = max(_sublanes(x.dtype), _sublanes(out_dtype))

    # Approximate VMEM bytes per row (lane dim padded to a 128 multiple).
    lanes_padded = max(LANE, ((W + LANE - 1) // LANE) * LANE)
    bytes_per_row = lanes_padded * (in_item + out_item)
    total_bytes = R * bytes_per_row

    max_block_rows = max(
        row_align,
        (TARGET_BLOCK_BYTES // bytes_per_row) // row_align * row_align,
    )
    num_blocks = pl.cdiv(R, max_block_rows)
    # Force >= 2 balanced steps once there is enough traffic: input DMA of
    # step i+1 overlaps the output write-back of step i, and v7x's two
    # TensorCores both get work.
    if num_blocks == 1 and R >= 2 * row_align and total_bytes >= MIN_SPLIT_BYTES:
        num_blocks = 2

    if num_blocks == 1:
        block_rows = R  # full-extent block: always a legal shape
    else:
        block_rows = ((pl.cdiv(R, num_blocks) + row_align - 1)
                      // row_align) * row_align
        num_blocks = pl.cdiv(R, block_rows)  # re-derive after balancing

    n = x.size
    cost = pl.CostEstimate(
        flops=n,
        transcendentals=0,
        bytes_accessed=n * in_item + n * out_item,
    )

    out2d = pl.pallas_call(
        _make_kernel(out_dtype),
        out_shape=jax.ShapeDtypeStruct((R, W), out_dtype),
        grid_spec=pltpu.PrefetchScalarGridSpec(
            num_scalar_prefetch=0,
            grid=(num_blocks,),
            in_specs=[pl.BlockSpec((block_rows, W), lambda i: (i, 0))],
            out_specs=pl.BlockSpec((block_rows, W), lambda i: (i, 0)),
        ),
        compiler_params=pltpu.CompilerParams(
            dimension_semantics=("parallel",),  # megacore sharding on v7x
            vmem_limit_bytes=32 << 20,          # safe on v5e/v6e/v7x
        ),
        cost_estimate=cost,
    )(x2d)

    return out2d.reshape(orig_shape)


if __name__ == "__main__":
    key = jax.random.PRNGKey(0)
    k1, k2, k3 = jax.random.split(key, 3)

    # 1) Canonical small NCHW float32 batch (values in [0, 255]); float stays float32.
    x = jax.random.uniform(k1, (2, 4, 16, 16), dtype=jnp.float32) * 255.0
    y = jax.block_until_ready(lambda_forward(x))
    assert y.shape == x.shape and y.dtype == jnp.float32
    assert jnp.allclose(y, x / 255.0, atol=1e-6, rtol=1e-6), "float32 path mismatch"

    # 2) uint8 image path: in-kernel cast, float32 out (torch promotion rule).
    xu8 = (jax.random.uniform(k2, (2, 3, 32, 32)) * 255.0).astype(jnp.uint8)
    yu8 = jax.block_until_ready(lambda_forward(xu8))
    assert yu8.dtype == jnp.float32
    assert jnp.allclose(yu8, xu8.astype(jnp.float32) / 255.0, atol=1e-6), \
        "uint8 path mismatch"

    # 3) Large-enough case to exercise the balanced multi-block grid with a
    #    ragged (masked) last block -- no pad/slice passes.
    x3 = jax.random.uniform(k3, (3, 5, 90, 128), dtype=jnp.float32) * 255.0
    y3 = jax.block_until_ready(lambda_forward(x3))
    assert jnp.allclose(y3, x3 / 255.0, atol=1e-6, rtol=1e-6), \
        "multi-block / ragged-tail path mismatch"

    print("KERNEL_OK")
</pallas_src>

<mosaic_0001>
module attributes {stable_mosaic.version = 11 : i64} {
  func.func @_lambda_kernel(%arg0: i32, %arg1: memref<128x16xf32, #tpu.memory_space<vmem>>, %arg2: memref<128x16xf32, #tpu.memory_space<vmem>>) attributes {dimension_semantics = [#tpu.dimension_semantics<parallel>], iteration_bounds = array<i64: 1>, scalar_prefetch = 0 : i64, scratch_operands = 0 : i64, tpu.core_type = #tpu.core_type<tc>, window_params = [{transform_indices = @transform_0, window_bounds = array<i64: 128, 16>}, {transform_indices = @transform_1, window_bounds = array<i64: 128, 16>}]} {
    %c0 = arith.constant 0 : index
    %c0_0 = arith.constant 0 : index
    %0 = vector.load %arg1[%c0, %c0_0] : memref<128x16xf32, #tpu.memory_space<vmem>>, vector<128x16xf32>
    %cst = arith.constant 2.550000e+02 : f32
    %1 = vector.broadcast %cst : f32 to vector<128x16xf32>
    %2 = arith.divf %0, %1 : vector<128x16xf32>
    %c0_1 = arith.constant 0 : index
    %c0_2 = arith.constant 0 : index
    %3 = vector.load %arg2[%c0_1, %c0_2] : memref<128x16xf32, #tpu.memory_space<vmem>>, vector<128x16xf32>
    tpu.vector_store %arg2[%c0_1, %c0_2], %2 {strides = array<i32>} : memref<128x16xf32, #tpu.memory_space<vmem>>, vector<128x16xf32>,
    return
  }
  func.func @transform_0(%arg0: i32) -> (i32, i32) {
    %c0_i32 = arith.constant 0 : i32
    %c0_i32_0 = arith.constant 0 : i32
    return %arg0, %c0_i32 : i32, i32
  }
  func.func @transform_1(%arg0: i32) -> (i32, i32) {
    %c0_i32 = arith.constant 0 : i32
    %c0_i32_0 = arith.constant 0 : i32
    return %arg0, %c0_i32 : i32, i32
  }
}

</mosaic_0001>

<llo_original>
// kernel: tpu_custom_call.1
$region0: #{tpu_custom_call.1}
  #allocation0 [shape = 'u32[]', space=smem, size = 0x4, offset = 0x4, fixed_abs, tag = 'smem constant byte address 0x4 - core index']
  #allocation1 [shape = 'u32[144,128]{1,0:T(1,128)}', space=vmem, size = 0x12000, scoped, tag = 'internal scratch']
  %s0 = inlined_call_operand.vmem [shape: f32[128,16], index: 0, kind: input, shape index: {}]
  %s1 = inlined_call_operand.vmem [shape: f32[128,16], index: 1, kind: output, shape index: {}]
  %s2 = sld [smem:[#allocation0]]
  $region14: #{tpu_custom_call.1} parent=0
    _
  %s4 = ssub.s32 1, %s2
  %s5 = scalar_select 0, %s4, %s2
  // Predicated region
  $region2: #{tpu_custom_call.1} parent=0 // pred_check
    _
  $region3: #{tpu_custom_call.1} parent=0 // pred_check_branch
    %7 = sbr.rel (0) target = $region5
  $region4: #{tpu_custom_call.1} parent=0 // pred_region
    _
  $region5: #{tpu_custom_call.1} parent=0 // pred_fallthru
    _
  %v8 = vld [vmem:[%s0] sm:$0xff]
  %v9 = vld [vmem:[%s0 + $0x8] sm:$0xff]
  %v10 = vld [vmem:[%s0 + $0x10] sm:$0xff]
  %v11 = vld [vmem:[%s0 + $0x18] sm:$0xff]
  %v12 = vld [vmem:[%s0 + $0x20] sm:$0xff]
  %v13 = vld [vmem:[%s0 + $0x28] sm:$0xff]
  %v14 = vld [vmem:[%s0 + $0x30] sm:$0xff]
  %v15 = vld [vmem:[%s0 + $0x38] sm:$0xff]
  %v16 = vld [vmem:[%s0 + $0x40] sm:$0xff]
  %v17 = vld [vmem:[%s0 + $0x48] sm:$0xff]
  %v18 = vld [vmem:[%s0 + $0x50] sm:$0xff]
  %v19 = vld [vmem:[%s0 + $0x58] sm:$0xff]
  %v20 = vld [vmem:[%s0 + $0x60] sm:$0xff]
  %v21 = vld [vmem:[%s0 + $0x68] sm:$0xff]
  %v22 = vld [vmem:[%s0 + $0x70] sm:$0xff]
  %v23 = vld [vmem:[%s0 + $0x78] sm:$0xff]
  %v24 = vrcp.pop 255.0
  %v25 = vmul.f32 %v8, %v24
  %v26 = vmul.f32 %v9, %v24
  %v27 = vmul.f32 %v10, %v24
  %v28 = vmul.f32 %v11, %v24
  %v29 = vmul.f32 %v12, %v24
  %v30 = vmul.f32 %v13, %v24
  %v31 = vmul.f32 %v14, %v24
  %v32 = vmul.f32 %v15, %v24
  %v33 = vmul.f32 %v16, %v24
  %v34 = vmul.f32 %v17, %v24
  %v35 = vmul.f32 %v18, %v24
  %v36 = vmul.f32 %v19, %v24
  %v37 = vmul.f32 %v20, %v24
  %v38 = vmul.f32 %v21, %v24
  %v39 = vmul.f32 %v22, %v24
  %v40 = vmul.f32 %v23, %v24
  %vm41 = vcmask 130048
  %42 = vst.msk [vmem:[%s1] sm:$0xff] %vm41, %v25
  %43 = vst.msk [vmem:[%s1 + $0x8] sm:$0xff] %vm41, %v26
  %44 = vst.msk [vmem:[%s1 + $0x10] sm:$0xff] %vm41, %v27
  %45 = vst.msk [vmem:[%s1 + $0x18] sm:$0xff] %vm41, %v28
  %46 = vst.msk [vmem:[%s1 + $0x20] sm:$0xff] %vm41, %v29
  %47 = vst.msk [vmem:[%s1 + $0x28] sm:$0xff] %vm41, %v30
  %48 = vst.msk [vmem:[%s1 + $0x30] sm:$0xff] %vm41, %v31
  %49 = vst.msk [vmem:[%s1 + $0x38] sm:$0xff] %vm41, %v32
  %50 = vst.msk [vmem:[%s1 + $0x40] sm:$0xff] %vm41, %v33
  %51 = vst.msk [vmem:[%s1 + $0x48] sm:$0xff] %vm41, %v34
  %52 = vst.msk [vmem:[%s1 + $0x50] sm:$0xff] %vm41, %v35
  %53 = vst.msk [vmem:[%s1 + $0x58] sm:$0xff] %vm41, %v36
  %54 = vst.msk [vmem:[%s1 + $0x60] sm:$0xff] %vm41, %v37
  %55 = vst.msk [vmem:[%s1 + $0x68] sm:$0xff] %vm41, %v38
  %56 = vst.msk [vmem:[%s1 + $0x70] sm:$0xff] %vm41, %v39
  %57 = vst.msk [vmem:[%s1 + $0x78] sm:$0xff] %vm41, %v40
  // Predicated region
  $region6: #{tpu_custom_call.1} parent=0 // pred_check
    _
  $region7: #{tpu_custom_call.1} parent=0 // pred_check_branch
    %59 = sbr.rel (0) target = $region9
  $region8: #{tpu_custom_call.1} parent=0 // pred_region
    _
  $region9: #{tpu_custom_call.1} parent=0 // pred_fallthru
    _
  // Predicated region
  $region10: #{tpu_custom_call.1} parent=0 // pred_check
    _
  $region11: #{tpu_custom_call.1} parent=0 // pred_check_branch
    %61 = sbr.rel (0) target = $region13
  $region12: #{tpu_custom_call.1} parent=0 // pred_region
    _
  $region13: #{tpu_custom_call.1} parent=0 // pred_fallthru
    _

</llo_original>
